<compile_context>
chip_gen: v7x
topology: tpu7x:2x2x1
jax: 0.10.0
libtpu: 0.0.40
codegen_flags: <defaults>
</compile_context>

<pallas_src>
import jax
import jax.numpy as jnp
from jax.experimental import pallas as pl
from jax.experimental.pallas import tpu as pltpu


def _round_up(x: int, m: int) -> int:
    return (x + m - 1) // m * m


def _embedding_gather_kernel(ids_ref, table_ref, out_ref, copy_sems):
    # ids_ref:   (n_padded,) int32 in SMEM (scalar-prefetched token ids, pre-clamped)
    # table_ref: (V, D) f32 in HBM (memory_space=pl.ANY) -- never streamed wholesale
    # out_ref:   (tile_t, D) f32 VMEM output block for this grid step
    # copy_sems: (n_inflight,) DMA semaphores -- sliding window of outstanding copies
    tile_t = out_ref.shape[0]
    n_inflight = copy_sems.shape[0]
    base = pl.program_id(0) * tile_t

    def row_copy(t):
        tok = ids_ref[base + t]
        return pltpu.make_async_copy(
            table_ref.at[pl.ds(tok, 1), :],     # (1, D) row of the HBM table
            out_ref.at[pl.ds(t, 1), :],         # (1, D) row of the output block
            copy_sems.at[t % n_inflight],
        )

    n_prime = min(n_inflight, tile_t)

    # Prime the window.
    @pl.loop(0, n_prime)
    def _issue_first(t):
        row_copy(t).start()

    # Steady state: retire the oldest copy, issue the next one.
    @pl.loop(n_prime, tile_t)
    def _steady(t):
        row_copy(t - n_inflight).wait()
        row_copy(t).start()

    # Drain the remaining outstanding copies.
    @pl.loop(tile_t - n_prime, tile_t)
    def _drain(t):
        row_copy(t).wait()


def word_embedding_forward(indices, table, *, max_tile=512, max_inflight=8):
    """Equivalent of nn.Embedding(vocab, dim)(indices).

    indices: int array of shape [S] or [B, S]
    table:   float32 array of shape [V, D]
    returns: float32 array of shape indices.shape + (D,)
    """
    orig_shape = indices.shape
    V, D = table.shape

    # Clamp ids to valid rows (PyTorch raises on OOB; we clamp -- also guarantees the
    # row DMA can never read out of bounds in HBM).
    flat_ids = jnp.clip(indices.reshape(-1).astype(jnp.int32), 0, V - 1)
    n_tokens = flat_ids.shape[0]

    # Token tile: multiple of 8 (f32 sublane), capped at max_tile.  Output block is
    # tile_t * D * 4 bytes (double-buffered by the pipeline) -- tiny vs VMEM on all
    # generations, so no vmem_limit_bytes override is needed.
    tile_t = min(max_tile, _round_up(n_tokens, 8))
    n_padded = _round_up(n_tokens, tile_t)
    num_tiles = n_padded // tile_t
    n_inflight = max(1, min(max_inflight, tile_t))

    # Pad with id 0 (valid row); padded rows are sliced off below.
    ids_padded = jnp.pad(flat_ids, (0, n_padded - n_tokens))

    itemsize = table.dtype.itemsize
    cost = pl.CostEstimate(
        flops=0,
        transcendentals=0,
        # gathered table rows + output writeback + ids
        bytes_accessed=2 * n_padded * D * itemsize + n_padded * 4,
    )

    out_padded = pl.pallas_call(
        _embedding_gather_kernel,
        out_shape=jax.ShapeDtypeStruct((n_padded, D), table.dtype),
        grid_spec=pltpu.PrefetchScalarGridSpec(
            num_scalar_prefetch=1,                  # ids land in SMEM before the grid runs
            grid=(num_tiles,),
            in_specs=[
                # Table stays in HBM; rows are gathered with explicit DMAs.
                pl.BlockSpec(memory_space=pl.ANY),
            ],
            out_specs=pl.BlockSpec((tile_t, D), lambda i, ids: (i, 0)),
            scratch_shapes=[pltpu.SemaphoreType.DMA((n_inflight,))],
        ),
        compiler_params=pltpu.CompilerParams(
            # Independent output tiles: lets v7x's two TensorCores split the token axis.
            dimension_semantics=("parallel",),
        ),
        cost_estimate=cost,
    )(ids_padded, table)

    out = out_padded[:n_tokens]
    return out.reshape(*orig_shape, D)


if __name__ == "__main__":
    # Module hyper-parameters (small, consistent with the forward pass).
    vocab_length = 64
    embedding_dim = 128
    batch, seq = 2, 8

    key = jax.random.PRNGKey(0)
    k_table, k_ids = jax.random.split(key)

    # nn.Embedding default init: weight ~ N(0, 1). Deterministic synthetic init.
    embedding_table = jax.random.normal(
        k_table, (vocab_length, embedding_dim), dtype=jnp.float32
    )

    # Word-index input, shape [batch, seq].
    input_sentence = jax.random.randint(
        k_ids, (batch, seq), 0, vocab_length, dtype=jnp.int32
    )

    out = word_embedding_forward(input_sentence, embedding_table)
    out = jax.block_until_ready(out)

    # Reference check against plain JAX gather (same semantics as nn.Embedding).
    ref = embedding_table[input_sentence]
    assert out.shape == (batch, seq, embedding_dim), out.shape
    assert jnp.allclose(out, ref), "mismatch vs reference embedding lookup (2-D input)"

    # Also exercise the 1-D [seq] input path with a non-multiple-of-8 length (padding).
    ids_1d = jax.random.randint(
        jax.random.PRNGKey(1), (5,), 0, vocab_length, dtype=jnp.int32
    )
    out_1d = jax.block_until_ready(word_embedding_forward(ids_1d, embedding_table))
    assert out_1d.shape == (5, embedding_dim), out_1d.shape
    assert jnp.allclose(out_1d, embedding_table[ids_1d]), "mismatch (1-D input)"

    print("KERNEL_OK")
</pallas_src>

<mosaic_0001>
module attributes {stable_mosaic.version = 11 : i64} {
  func.func @_embedding_gather_kernel(%arg0: i32, %arg1: memref<16xi32, #tpu.memory_space<smem>>, %arg2: memref<64x128xf32, #tpu.memory_space<any>>, %arg3: memref<16x128xf32, #tpu.memory_space<vmem>>, %arg4: memref<8x!tpu.dma_semaphore, #tpu.memory_space<semaphore_mem>>) attributes {dimension_semantics = [#tpu.dimension_semantics<parallel>], iteration_bounds = array<i64: 1>, scalar_prefetch = 1 : i64, scratch_operands = 1 : i64, tpu.core_type = #tpu.core_type<tc>, window_params = [{}, {transform_indices = @transform_1, window_bounds = array<i64: 16, 128>}]} {
    %c16_i32 = arith.constant 16 : i32
    %0 = arith.muli %arg0, %c16_i32 : i32
    %c0_i32 = arith.constant 0 : i32
    %c8_i32 = arith.constant 8 : i32
    %1 = arith.addi %c0_i32, %c8_i32 : i32
    %c1_i32 = arith.constant 1 : i32
    scf.for %arg5 = %c0_i32 to %1 step %c1_i32  : i32 {
      %c1_i32_9 = arith.constant 1 : i32
      %4 = arith.muli %arg5, %c1_i32_9 : i32
      %c0_i32_10 = arith.constant 0 : i32
      %5 = arith.addi %c0_i32_10, %4 : i32
      %6 = arith.addi %0, %5 : i32
      %7 = arith.index_cast %6 : i32 to index
      %8 = memref.load %arg1[%7] : memref<16xi32, #tpu.memory_space<smem>>
      %c8_i32_11 = arith.constant 8 : i32
      %c0_i32_12 = arith.constant 0 : i32
      %9 = arith.cmpi eq, %c8_i32_11, %c0_i32_12 : i32
      %c1_i32_13 = arith.constant 1 : i32
      %10 = arith.select %9, %c1_i32_13, %c8_i32_11 : i32
      %11 = arith.remsi %5, %10 : i32
      %c0_i32_14 = arith.constant 0 : i32
      %12 = arith.cmpi ne, %11, %c0_i32_14 : i32
      %c0_i32_15 = arith.constant 0 : i32
      %13 = arith.cmpi slt, %11, %c0_i32_15 : i32
      %c0_i32_16 = arith.constant 0 : i32
      %14 = arith.cmpi slt, %10, %c0_i32_16 : i32
      %15 = arith.xori %13, %14 : i1
      %16 = arith.andi %15, %12 : i1
      %17 = arith.addi %11, %10 : i32
      %18 = arith.select %16, %17, %11 : i32
      %c0_i32_17 = arith.constant 0 : i32
      %19 = tpu.memref_slice %arg2[%8, %c0_i32_17] : memref<64x128xf32, #tpu.memory_space<any>> -> memref<1x128xf32, #tpu.memory_space<any>>
      %c0_i32_18 = arith.constant 0 : i32
      %20 = tpu.memref_slice %arg3[%5, %c0_i32_18] : memref<16x128xf32, #tpu.memory_space<vmem>> -> memref<1x128xf32, #tpu.memory_space<vmem>>
      %21 = tpu.memref_slice %arg4[%18] : memref<8x!tpu.dma_semaphore, #tpu.memory_space<semaphore_mem>> -> memref<1x!tpu.dma_semaphore, #tpu.memory_space<semaphore_mem>>
      %22 = tpu.memref_squeeze %21 : memref<1x!tpu.dma_semaphore, #tpu.memory_space<semaphore_mem>> -> memref<!tpu.dma_semaphore, #tpu.memory_space<semaphore_mem>>
      tpu.enqueue_dma source(%19 : memref<1x128xf32, #tpu.memory_space<any>>) target(%20 : memref<1x128xf32, #tpu.memory_space<vmem>>) target_semaphore(%22 : memref<!tpu.dma_semaphore, #tpu.memory_space<semaphore_mem>>)
    }
    %c8_i32_0 = arith.constant 8 : i32
    %c0_i32_1 = arith.constant 0 : i32
    %c8_i32_2 = arith.constant 8 : i32
    %2 = arith.addi %c0_i32_1, %c8_i32_2 : i32
    %c1_i32_3 = arith.constant 1 : i32
    scf.for %arg5 = %c0_i32_1 to %2 step %c1_i32_3  : i32 {
      %c1_i32_9 = arith.constant 1 : i32
      %4 = arith.muli %arg5, %c1_i32_9 : i32
      %c8_i32_10 = arith.constant 8 : i32
      %5 = arith.addi %c8_i32_10, %4 : i32
      %c8_i32_11 = arith.constant 8 : i32
      %6 = arith.subi %5, %c8_i32_11 : i32
      %7 = arith.addi %0, %6 : i32
      %8 = arith.index_cast %7 : i32 to index
      %9 = memref.load %arg1[%8] : memref<16xi32, #tpu.memory_space<smem>>
      %c8_i32_12 = arith.constant 8 : i32
      %c0_i32_13 = arith.constant 0 : i32
      %10 = arith.cmpi eq, %c8_i32_12, %c0_i32_13 : i32
      %c1_i32_14 = arith.constant 1 : i32
      %11 = arith.select %10, %c1_i32_14, %c8_i32_12 : i32
      %12 = arith.remsi %6, %11 : i32
      %c0_i32_15 = arith.constant 0 : i32
      %13 = arith.cmpi ne, %12, %c0_i32_15 : i32
      %c0_i32_16 = arith.constant 0 : i32
      %14 = arith.cmpi slt, %12, %c0_i32_16 : i32
      %c0_i32_17 = arith.constant 0 : i32
      %15 = arith.cmpi slt, %11, %c0_i32_17 : i32
      %16 = arith.xori %14, %15 : i1
      %17 = arith.andi %16, %13 : i1
      %18 = arith.addi %12, %11 : i32
      %19 = arith.select %17, %18, %12 : i32
      %c0_i32_18 = arith.constant 0 : i32
      %20 = tpu.memref_slice %arg2[%9, %c0_i32_18] : memref<64x128xf32, #tpu.memory_space<any>> -> memref<1x128xf32, #tpu.memory_space<any>>
      %c0_i32_19 = arith.constant 0 : i32
      %21 = tpu.memref_slice %arg3[%6, %c0_i32_19] : memref<16x128xf32, #tpu.memory_space<vmem>> -> memref<1x128xf32, #tpu.memory_space<vmem>>
      %22 = tpu.memref_slice %arg4[%19] : memref<8x!tpu.dma_semaphore, #tpu.memory_space<semaphore_mem>> -> memref<1x!tpu.dma_semaphore, #tpu.memory_space<semaphore_mem>>
      %23 = tpu.memref_squeeze %22 : memref<1x!tpu.dma_semaphore, #tpu.memory_space<semaphore_mem>> -> memref<!tpu.dma_semaphore, #tpu.memory_space<semaphore_mem>>
      tpu.wait_dma2 semaphore(%23 : memref<!tpu.dma_semaphore, #tpu.memory_space<semaphore_mem>>) src(%20 : memref<1x128xf32, #tpu.memory_space<any>>) dst(%21 : memref<1x128xf32, #tpu.memory_space<vmem>>)
      %24 = arith.addi %0, %5 : i32
      %25 = arith.index_cast %24 : i32 to index
      %26 = memref.load %arg1[%25] : memref<16xi32, #tpu.memory_space<smem>>
      %c8_i32_20 = arith.constant 8 : i32
      %c0_i32_21 = arith.constant 0 : i32
      %27 = arith.cmpi eq, %c8_i32_20, %c0_i32_21 : i32
      %c1_i32_22 = arith.constant 1 : i32
      %28 = arith.select %27, %c1_i32_22, %c8_i32_20 : i32
      %29 = arith.remsi %5, %28 : i32
      %c0_i32_23 = arith.constant 0 : i32
      %30 = arith.cmpi ne, %29, %c0_i32_23 : i32
      %c0_i32_24 = arith.constant 0 : i32
      %31 = arith.cmpi slt, %29, %c0_i32_24 : i32
      %c0_i32_25 = arith.constant 0 : i32
      %32 = arith.cmpi slt, %28, %c0_i32_25 : i32
      %33 = arith.xori %31, %32 : i1
      %34 = arith.andi %33, %30 : i1
      %35 = arith.addi %29, %28 : i32
      %36 = arith.select %34, %35, %29 : i32
      %c0_i32_26 = arith.constant 0 : i32
      %37 = tpu.memref_slice %arg2[%26, %c0_i32_26] : memref<64x128xf32, #tpu.memory_space<any>> -> memref<1x128xf32, #tpu.memory_space<any>>
      %c0_i32_27 = arith.constant 0 : i32
      %38 = tpu.memref_slice %arg3[%5, %c0_i32_27] : memref<16x128xf32, #tpu.memory_space<vmem>> -> memref<1x128xf32, #tpu.memory_space<vmem>>
      %39 = tpu.memref_slice %arg4[%36] : memref<8x!tpu.dma_semaphore, #tpu.memory_space<semaphore_mem>> -> memref<1x!tpu.dma_semaphore, #tpu.memory_space<semaphore_mem>>
      %40 = tpu.memref_squeeze %39 : memref<1x!tpu.dma_semaphore, #tpu.memory_space<semaphore_mem>> -> memref<!tpu.dma_semaphore, #tpu.memory_space<semaphore_mem>>
      tpu.enqueue_dma source(%37 : memref<1x128xf32, #tpu.memory_space<any>>) target(%38 : memref<1x128xf32, #tpu.memory_space<vmem>>) target_semaphore(%40 : memref<!tpu.dma_semaphore, #tpu.memory_space<semaphore_mem>>)
    }
    %c8_i32_4 = arith.constant 8 : i32
    %c0_i32_5 = arith.constant 0 : i32
    %c8_i32_6 = arith.constant 8 : i32
    %3 = arith.addi %c0_i32_5, %c8_i32_6 : i32
    %c1_i32_7 = arith.constant 1 : i32
    scf.for %arg5 = %c0_i32_5 to %3 step %c1_i32_7  : i32 {
      %c1_i32_9 = arith.constant 1 : i32
      %4 = arith.muli %arg5, %c1_i32_9 : i32
      %c8_i32_10 = arith.constant 8 : i32
      %5 = arith.addi %c8_i32_10, %4 : i32
      %6 = arith.addi %0, %5 : i32
      %7 = arith.index_cast %6 : i32 to index
      %8 = memref.load %arg1[%7] : memref<16xi32, #tpu.memory_space<smem>>
      %c8_i32_11 = arith.constant 8 : i32
      %c0_i32_12 = arith.constant 0 : i32
      %9 = arith.cmpi eq, %c8_i32_11, %c0_i32_12 : i32
      %c1_i32_13 = arith.constant 1 : i32
      %10 = arith.select %9, %c1_i32_13, %c8_i32_11 : i32
      %11 = arith.remsi %5, %10 : i32
      %c0_i32_14 = arith.constant 0 : i32
      %12 = arith.cmpi ne, %11, %c0_i32_14 : i32
      %c0_i32_15 = arith.constant 0 : i32
      %13 = arith.cmpi slt, %11, %c0_i32_15 : i32
      %c0_i32_16 = arith.constant 0 : i32
      %14 = arith.cmpi slt, %10, %c0_i32_16 : i32
      %15 = arith.xori %13, %14 : i1
      %16 = arith.andi %15, %12 : i1
      %17 = arith.addi %11, %10 : i32
      %18 = arith.select %16, %17, %11 : i32
      %c0_i32_17 = arith.constant 0 : i32
      %19 = tpu.memref_slice %arg2[%8, %c0_i32_17] : memref<64x128xf32, #tpu.memory_space<any>> -> memref<1x128xf32, #tpu.memory_space<any>>
      %c0_i32_18 = arith.constant 0 : i32
      %20 = tpu.memref_slice %arg3[%5, %c0_i32_18] : memref<16x128xf32, #tpu.memory_space<vmem>> -> memref<1x128xf32, #tpu.memory_space<vmem>>
      %21 = tpu.memref_slice %arg4[%18] : memref<8x!tpu.dma_semaphore, #tpu.memory_space<semaphore_mem>> -> memref<1x!tpu.dma_semaphore, #tpu.memory_space<semaphore_mem>>
      %22 = tpu.memref_squeeze %21 : memref<1x!tpu.dma_semaphore, #tpu.memory_space<semaphore_mem>> -> memref<!tpu.dma_semaphore, #tpu.memory_space<semaphore_mem>>
      tpu.wait_dma2 semaphore(%22 : memref<!tpu.dma_semaphore, #tpu.memory_space<semaphore_mem>>) src(%19 : memref<1x128xf32, #tpu.memory_space<any>>) dst(%20 : memref<1x128xf32, #tpu.memory_space<vmem>>)
    }
    %c8_i32_8 = arith.constant 8 : i32
    return
  }
  func.func @transform_1(%arg0: i32, %arg1: memref<16xi32, #tpu.memory_space<smem>>) -> (i32, i32) {
    %c0_i32 = arith.constant 0 : i32
    %c0_i32_0 = arith.constant 0 : i32
    return %arg0, %c0_i32 : i32, i32
  }
}

</mosaic_0001>

<llo_original>
// kernel: tpu_custom_call.1
$region0: #{tpu_custom_call.1}
  #allocation0 [shape = 'u32[]', space=smem, size = 0x4, offset = 0x4, fixed_abs, tag = 'smem constant byte address 0x4 - core index']
  #allocation1 [shape = 'u32[144,128]{1,0:T(1,128)}', space=vmem, size = 0x12000, scoped, tag = 'internal scratch']
  #allocation2 [shape = 's32[8]{0}', space=sflag, size = 0x20, scoped, tag = 'scratch operand']
  #allocation3 [shape = 's32[1]{0}', space=sflag, size = 0x4, scoped, tag = 'scoped memory for tpu_custom_call.1']
  #allocation4 [shape = 'u8[512]{0}', space=smem, size = 0x200, scoped, tag = 'prefetched SMEM operand 0']
  #allocation7 [shape = 's32[]', space=sflag, size = 0x4, offset = 0, fixed_abs, tag = 'sflag constant byte address 0x0 - dummy sync flag']
  #allocation8 [shape = 's32[]', space=sflag, size = 0x4, offset = 0, fixed_abs, tag = 'sflag constant byte address 0x0 - dummy sync flag']
  #allocation9 [shape = 'u32[]', space=smem, size = 0x4, offset = 0x44, fixed_abs, tag = 'smem constant byte address 0x44 - assertion arg 0']
  #allocation10 [shape = 'u32[]', space=smem, size = 0x4, offset = 0x48, fixed_abs, tag = 'smem constant byte address 0x48 - assertion arg 1']
  #allocation11 [shape = 's32[]', space=sflag, size = 0x4, offset = 0, fixed_abs, tag = 'sflag constant byte address 0x0 - dummy sync flag']
  #allocation12 [shape = 's32[]', space=sflag, size = 0x4, offset = 0, fixed_abs, tag = 'sflag constant byte address 0x0 - dummy sync flag']
  %s0 = inlined_call_operand.hbm [shape: s32[16], index: 0, kind: input, shape index: {}]
  %s1 = inlined_call_operand.hbm [shape: f32[64,128], index: 1, kind: input, shape index: {}]
  %s2 = inlined_call_operand.hbm [shape: f32[16,128], index: 2, kind: output, shape index: {}]
  %s3 = sld [smem:[#allocation0]]
  $region39: #{tpu_custom_call.1} parent=0
    _
  %s5 = ssub.s32 1, %s3
  %s6 = scalar_select 0, %s5, %s3
  %8 = dma.hbm_to_smem %s0, 16, [#allocation4], [#allocation3]
  %9 = dma.done [#allocation3], 16
  %10 = sfence
  $region1: #{tpu_custom_call.1} parent=0
    #allocation5 [shape = 'u8[8192]{0}', space=vmem, size = 0x2000, scoped, tag = 'output window, operand 0, single buffered']
    #allocation6 [shape = 's32[1]{0}', space=sflag, size = 0x4, scoped, tag = 'scoped memory for tpu_custom_call.1']
    %11 = vsyncpa [#allocation6], 0
    %s12 = smul.u32 0, 16
    loop: start=0, step=1, limit=8
    $region2: #{tpu_custom_call.1} parent=1 // loop_pre_header
      _
    $region3: #{tpu_custom_call.1} parent=1 // loop_header
      %s14 = sphi 0, %s18
      %p15 = scmp.ge.s32.totalorder %s14, 8
    $region4: #{tpu_custom_call.1} parent=1 // loop_header_branch
      %17 = sbr.rel (%p15) target = $region8
    $region5: #{tpu_custom_call.1} parent=1 // loop_body
      %s19 = sadd.s32 %s12, %s14
      %s20 = sld [smem:[#allocation4 + %s19]]
      %p21 = scmp.lt.s32.totalorder %s14, 0
      %s22 = ssub.s32 0, %s14
      %s23 = scalar_select %p21, %s22, %s14
      %s24 = sand.u32 %s23, 7
      %s25 = ssub.s32 0, %s24
      %s26 = scalar_select %p21, %s25, %s24
      %p27 = scmp.ne.s32.totalorder %s26, 0
      %p28 = scmp.lt.s32.totalorder %s26, 0
      %p29 = pnand %p28, %p27
      %p30 = pneg %p29
      %s31 = sadd.s32 %s26, 8
      %s32 = scalar_select %p30, %s31, %s26
      %s33 = smul.addr %s20, 16
      %s34 = scalar_lea.hbm %s1, %s33
      %s35 = scalar_lea.vmem [#allocation5], %s14
      %s36 = scalar_lea.sflag [#allocation2], %s32
      // Predicated region
      $region9: #{tpu_custom_call.1} parent=5 // pred_check
        _
      $region10: #{tpu_custom_call.1} parent=5 // pred_check_branch
        %38 = sbr.rel target = $region12
      $region11: #{tpu_custom_call.1} parent=5 // pred_region
        %39 = sst [smem:[#allocation9]] [#allocation8]
        %40 = sst [smem:[#allocation10]] [#allocation7]
      $region12: #{tpu_custom_call.1} parent=5 // pred_fallthru
        _
      %42 = shalt.err (0)
      %s44 = sshll.u32 %s35, 4
      %s45 = int_to_ptr.vmem [resolvable:$true] %s44
      %47 = dma.hbm_to_vmem [thread:$0]  %s34, 16, %s45, %s36
    $region6: #{tpu_custom_call.1} parent=1 // loop_footer
      %s18 = sadd.s32 1, %s14
    $region7: #{tpu_custom_call.1} parent=1 // loop_footer_branch
      %13 = sbr.rel target = $region3
    $region8: #{tpu_custom_call.1} parent=1 // loop_exit
      _
    loop: start=0, step=1, limit=8
    $region13: #{tpu_custom_call.1} parent=1 // loop_pre_header
      _
    $region14: #{tpu_custom_call.1} parent=1 // loop_header
      %s49 = sphi 0, %s53
      %p50 = scmp.ge.s32.totalorder %s49, 8
    $region15: #{tpu_custom_call.1} parent=1 // loop_header_branch
      %52 = sbr.rel (%p50) target = $region19
    $region16: #{tpu_custom_call.1} parent=1 // loop_body
      %s54 = sadd.s32 %s49, 8
      %s55 = sadd.s32 %s12, %s49
      %s56 = sld [smem:[#allocation4 + %s55]]
      %p57 = scmp.lt.s32.totalorder %s49, 0
      %s58 = ssub.s32 0, %s49
      %s59 = scalar_select %p57, %s58, %s49
      %s60 = sand.u32 %s59, 7
      %s61 = ssub.s32 0, %s60
      %s62 = scalar_select %p57, %s61, %s60
      %p63 = scmp.ne.s32.totalorder %s62, 0
      %p64 = scmp.lt.s32.totalorder %s62, 0
      %p65 = pnand %p64, %p63
      %p66 = pneg %p65
      %s67 = sadd.s32 %s62, 8
      %s68 = scalar_select %p66, %s67, %s62
      %s69 = scalar_lea.sflag [#allocation2], %s68
      %s70 = smul.u32 1, 1
      %s71 = sshll.u32 %s70, 4
      %72 = dma.done %s69, %s71
      %s73 = sadd.s32 %s12, %s54
      %s74 = sld [smem:[#allocation4 + %s73]]
      %p75 = scmp.lt.s32.totalorder %s54, 0
      %s76 = ssub.s32 0, %s54
      %s77 = scalar_select %p75, %s76, %s54
      %s78 = sand.u32 %s77, 7
      %s79 = ssub.s32 0, %s78
      %s80 = scalar_select %p75, %s79, %s78
      %p81 = scmp.ne.s32.totalorder %s80, 0
      %p82 = scmp.lt.s32.totalorder %s80, 0
      %p83 = pnand %p82, %p81
      %p84 = pneg %p83
      %s85 = sadd.s32 %s80, 8
      %s86 = scalar_select %p84, %s85, %s80
      %s87 = smul.addr %s74, 16
      %s88 = scalar_lea.hbm %s1, %s87
      %s89 = scalar_lea.vmem [#allocation5], %s54
      %s90 = scalar_lea.sflag [#allocation2], %s86
      // Predicated region
      $region20: #{tpu_custom_call.1} parent=16 // pred_check
        _
      $region21: #{tpu_custom_call.1} parent=16 // pred_check_branch
        %92 = sbr.rel target = $region23
      $region22: #{tpu_custom_call.1} parent=16 // pred_region
        %93 = sst [smem:[#allocation9]] [#allocation12]
        %94 = sst [smem:[#allocation10]] [#allocation11]
      $region23: #{tpu_custom_call.1} parent=16 // pred_fallthru
        _
      %96 = shalt.err (0)
      %s98 = sshll.u32 %s89, 4
      %s99 = int_to_ptr.vmem [resolvable:$true] %s98
      %101 = dma.hbm_to_vmem [thread:$0]  %s88, 16, %s99, %s90
    $region17: #{tpu_custom_call.1} parent=1 // loop_footer
      %s53 = sadd.s32 1, %s49
    $region18: #{tpu_custom_call.1} parent=1 // loop_footer_branch
      %48 = sbr.rel target = $region14
    $region19: #{tpu_custom_call.1} parent=1 // loop_exit
      _
    loop: start=0, step=1, limit=8
    $region24: #{tpu_custom_call.1} parent=1 // loop_pre_header
      _
    $region25: #{tpu_custom_call.1} parent=1 // loop_header
      %s103 = sphi 0, %s107
      %p104 = scmp.ge.s32.totalorder %s103, 8
    $region26: #{tpu_custom_call.1} parent=1 // loop_header_branch
      %106 = sbr.rel (%p104) target = $region30
    $region27: #{tpu_custom_call.1} parent=1 // loop_body
      %s108 = sadd.s32 %s103, 8
      %s109 = sadd.s32 %s12, %s108
      %s110 = sld [smem:[#allocation4 + %s109]]
      %p111 = scmp.lt.s32.totalorder %s108, 0
      %s112 = ssub.s32 0, %s108
      %s113 = scalar_select %p111, %s112, %s108
      %s114 = sand.u32 %s113, 7
      %s115 = ssub.s32 0, %s114
      %s116 = scalar_select %p111, %s115, %s114
      %p117 = scmp.ne.s32.totalorder %s116, 0
      %p118 = scmp.lt.s32.totalorder %s116, 0
      %p119 = pnand %p118, %p117
      %p120 = pneg %p119
      %s121 = sadd.s32 %s116, 8
      %s122 = scalar_select %p120, %s121, %s116
      %s123 = scalar_lea.sflag [#allocation2], %s122
      %s124 = smul.u32 1, 1
      %s125 = sshll.u32 %s124, 4
      %126 = dma.done %s123, %s125
    $region28: #{tpu_custom_call.1} parent=1 // loop_footer
      %s107 = sadd.s32 1, %s103
    $region29: #{tpu_custom_call.1} parent=1 // loop_footer_branch
      %102 = sbr.rel target = $region25
    $region30: #{tpu_custom_call.1} parent=1 // loop_exit
      _
    // Predicated region
    $region31: #{tpu_custom_call.1} parent=1 // pred_check
      _
    $region32: #{tpu_custom_call.1} parent=1 // pred_check_branch
      %128 = sbr.rel (0) target = $region34
    $region33: #{tpu_custom_call.1} parent=1 // pred_region
      %s130 = ssub.s32 256, 256
      %131 = vsyncadd [#allocation6], %s130
      %s132 = sshll.u32 [#allocation5], 4
      %s133 = int_to_ptr.vmem [resolvable:$true] %s132
      %138 = dma.vmem_to_hbm [thread:$0]  %s133, 256, %s2, [#allocation6], 128, 128, 8
    $region34: #{tpu_custom_call.1} parent=1 // pred_fallthru
      _
    // Predicated region
    $region35: #{tpu_custom_call.1} parent=1 // pred_check
      _
    $region36: #{tpu_custom_call.1} parent=1 // pred_check_branch
      %140 = sbr.rel (0) target = $region38
    $region37: #{tpu_custom_call.1} parent=1 // pred_region
      %141 = dma.done [#allocation6], 256
    $region38: #{tpu_custom_call.1} parent=1 // pred_fallthru
      _
    %142 = vsyncpa [#allocation6], 1
  %143 = vsyncmov [#allocation2]
  %s144 = vpop.sfrf %143
  %p145 = scmp.eq.s32.totalorder %s144, 0
  %p146 = pneg %p145
  %148 = shalt.err (%p146)
  %s149 = scalar_lea.sflag [#allocation2], 1
  %150 = vsyncmov %s149
  %s151 = vpop.sfrf %150
  %p152 = scmp.eq.s32.totalorder %s151, 0
  %p153 = pneg %p152
  %155 = shalt.err (%p153)
  %s156 = scalar_lea.sflag [#allocation2], 2
  %157 = vsyncmov %s156
  %s158 = vpop.sfrf %157
  %p159 = scmp.eq.s32.totalorder %s158, 0
  %p160 = pneg %p159
  %162 = shalt.err (%p160)
  %s163 = scalar_lea.sflag [#allocation2], 3
  %164 = vsyncmov %s163
  %s165 = vpop.sfrf %164
  %p166 = scmp.eq.s32.totalorder %s165, 0
  %p167 = pneg %p166
  %169 = shalt.err (%p167)
  %s170 = scalar_lea.sflag [#allocation2], 4
  %171 = vsyncmov %s170
  %s172 = vpop.sfrf %171
  %p173 = scmp.eq.s32.totalorder %s172, 0
  %p174 = pneg %p173
  %176 = shalt.err (%p174)
  %s177 = scalar_lea.sflag [#allocation2], 5
  %178 = vsyncmov %s177
  %s179 = vpop.sfrf %178
  %p180 = scmp.eq.s32.totalorder %s179, 0
  %p181 = pneg %p180
  %183 = shalt.err (%p181)
  %s184 = scalar_lea.sflag [#allocation2], 6
  %185 = vsyncmov %s184
  %s186 = vpop.sfrf %185
  %p187 = scmp.eq.s32.totalorder %s186, 0
  %p188 = pneg %p187
  %190 = shalt.err (%p188)
  %s191 = scalar_lea.sflag [#allocation2], 7
  %192 = vsyncmov %s191
  %s193 = vpop.sfrf %192
  %p194 = scmp.eq.s32.totalorder %s193, 0
  %p195 = pneg %p194
  %197 = shalt.err (%p195)

</llo_original>
